<compile_context>
chip_gen: v7x
topology: tpu7x:2x2x1
jax: 0.10.0
libtpu: 0.0.40
codegen_flags: <defaults>
</compile_context>

<pallas_src>
import jax
import jax.numpy as jnp
from jax.experimental import pallas as pl
from jax.experimental.pallas import tpu as pltpu

_LANES = 128
_TINY_BYTES = 256 << 10       # below this: single block, no pipelining needed
_MAX_BLOCK_BYTES = 1 << 20    # ~1 MiB per buffer: safe on v5e/v6e/v7x VMEM
_MIN_GRID_STEPS = 8           # keep enough steps for DMA/compute overlap


def _silu_kernel(x_ref, o_ref):
    x = x_ref[...]
    # bf16 math on bf16 inputs (v6e/v7x have bf16 VPU/EUP); f32 otherwise.
    compute_dtype = jnp.bfloat16 if x.dtype == jnp.bfloat16 else jnp.float32
    xc = x.astype(compute_dtype)
    # Exact identity: sigmoid(x) = 0.5 * (1 + tanh(0.5 * x)).
    # Single EUP transcendental; the two muls/add ride the VALU slots.
    sig = 0.5 * (jnp.tanh(xc * 0.5) + 1.0)
    o_ref[...] = (xc * sig).astype(o_ref.dtype)


def _silu_ref(x):
    return x * jax.nn.sigmoid(x)


def _run_silu_2d(x2d: jax.Array, *, alias_input: bool) -> jax.Array:
    """Runs the SiLU kernel over a lane-dense (rows, 128) slab."""
    rows = x2d.shape[0]
    itemsize = jnp.dtype(x2d.dtype).itemsize
    total_bytes = rows * _LANES * itemsize

    if total_bytes <= _TINY_BYTES:
        # Tiny: single whole-array block; pipelining overhead > benefit.
        block_rows = rows
    else:
        # Cap per-buffer block size at ~1 MiB and keep >= _MIN_GRID_STEPS
        # steps so input DMA / compute / output writeback overlap.
        max_rows_by_bytes = max(8, _MAX_BLOCK_BYTES // (_LANES * itemsize))
        rows_by_steps = pl.cdiv(rows, _MIN_GRID_STEPS)
        block_rows = min(max_rows_by_bytes, rows_by_steps)
        # Multiple of 32 sublanes covers f32/bf16/int8 sublane packing.
        block_rows = max(32, (block_rows // 32) * 32)
        block_rows = min(block_rows, rows)
    grid = (pl.cdiv(rows, block_rows),)

    n = rows * _LANES
    cost = pl.CostEstimate(
        flops=5 * n,              # mul, add, 2x scale, final mul
        transcendentals=n,        # one tanh per element
        bytes_accessed=2 * n * itemsize,
    )

    return pl.pallas_call(
        _silu_kernel,
        out_shape=jax.ShapeDtypeStruct((rows, _LANES), x2d.dtype),
        grid_spec=pltpu.PrefetchScalarGridSpec(
            num_scalar_prefetch=0,
            grid=grid,
            in_specs=[pl.BlockSpec((block_rows, _LANES), lambda i: (i, 0))],
            out_specs=pl.BlockSpec((block_rows, _LANES), lambda i: (i, 0)),
        ),
        compiler_params=pltpu.CompilerParams(
            dimension_semantics=("parallel",),
        ),
        cost_estimate=cost,
        input_output_aliases=({0: 0} if alias_input else {}),
    )(x2d)


def lambda_forward(x: jax.Array, *, donate: bool = False) -> jax.Array:
    """Applies func(x) = x * sigmoid(x) elementwise via a Pallas TPU kernel.

    Any shape is accepted; the data is viewed as a lane-dense [rows, 128]
    slab.  On the common n % 128 == 0 path this reshape is a free bitcast;
    on ragged sizes the kernel covers the 128-aligned bulk and the <128
    element tail is computed in plain JAX (no full-array pad/slice traffic).
    """
    orig_shape = x.shape
    n = x.size
    if n == 0:
        return x

    x_flat = jnp.reshape(x, (-1,))
    n_aligned = (n // _LANES) * _LANES

    if n_aligned == n:
        # Fast path: whole array is lane-aligned.
        x2d = jnp.reshape(x_flat, (n // _LANES, _LANES))
        out2d = _run_silu_2d(x2d, alias_input=donate)
        return jnp.reshape(out2d, orig_shape)

    if n_aligned == 0:
        # Fewer than 128 elements: not worth a kernel launch.
        return jnp.reshape(_silu_ref(x_flat), orig_shape)

    # Ragged: kernel on the aligned bulk, plain JAX on the (<128 elem) tail.
    bulk = jnp.reshape(x_flat[:n_aligned], (n_aligned // _LANES, _LANES))
    tail = x_flat[n_aligned:]
    bulk_out = jnp.reshape(_run_silu_2d(bulk, alias_input=False), (-1,))
    tail_out = _silu_ref(tail)
    out_flat = jnp.concatenate([bulk_out, tail_out])
    return jnp.reshape(out_flat, orig_shape)


if __name__ == "__main__":
    key = jax.random.PRNGKey(0)
    # NCHW input, small shapes: batch=2, channels=4, spatial=16x16.
    x = jax.random.normal(key, (2, 4, 16, 16), dtype=jnp.float32)

    out = lambda_forward(x)
    out = jax.block_until_ready(out)

    # Reference check against plain-JAX func(x).  The kernel uses the exact
    # tanh-based sigmoid identity, so tolerances are tight.
    ref = x * jax.nn.sigmoid(x)
    assert out.shape == x.shape and out.dtype == x.dtype
    assert jnp.allclose(out, ref, atol=1e-5, rtol=1e-5), float(
        jnp.max(jnp.abs(out - ref))
    )

    print("KERNEL_OK")
</pallas_src>

<mosaic_0001>
module attributes {stable_mosaic.version = 11 : i64} {
  func.func @_silu_kernel(%arg0: i32, %arg1: memref<16x128xf32, #tpu.memory_space<vmem>>, %arg2: memref<16x128xf32, #tpu.memory_space<vmem>>) attributes {dimension_semantics = [#tpu.dimension_semantics<parallel>], iteration_bounds = array<i64: 1>, scalar_prefetch = 0 : i64, scratch_operands = 0 : i64, tpu.core_type = #tpu.core_type<tc>, window_params = [{transform_indices = @transform_0, window_bounds = array<i64: 16, 128>}, {transform_indices = @transform_1, window_bounds = array<i64: 16, 128>}]} {
    %c0 = arith.constant 0 : index
    %c0_0 = arith.constant 0 : index
    %0 = vector.load %arg1[%c0, %c0_0] : memref<16x128xf32, #tpu.memory_space<vmem>>, vector<16x128xf32>
    %cst = arith.constant 5.000000e-01 : f32
    %1 = vector.broadcast %cst : f32 to vector<16x128xf32>
    %2 = arith.mulf %0, %1 : vector<16x128xf32>
    %3 = math.tanh %2 : vector<16x128xf32>
    %cst_1 = arith.constant 1.000000e+00 : f32
    %4 = vector.broadcast %cst_1 : f32 to vector<16x128xf32>
    %5 = arith.addf %3, %4 : vector<16x128xf32>
    %cst_2 = arith.constant 5.000000e-01 : f32
    %6 = vector.broadcast %cst_2 : f32 to vector<16x128xf32>
    %7 = arith.mulf %6, %5 : vector<16x128xf32>
    %8 = arith.mulf %0, %7 : vector<16x128xf32>
    %c0_3 = arith.constant 0 : index
    %c0_4 = arith.constant 0 : index
    %9 = vector.load %arg2[%c0_3, %c0_4] : memref<16x128xf32, #tpu.memory_space<vmem>>, vector<16x128xf32>
    tpu.vector_store %arg2[%c0_3, %c0_4], %8 {strides = array<i32>} : memref<16x128xf32, #tpu.memory_space<vmem>>, vector<16x128xf32>,
    return
  }
  func.func @transform_0(%arg0: i32) -> (i32, i32) {
    %c0_i32 = arith.constant 0 : i32
    %c0_i32_0 = arith.constant 0 : i32
    return %arg0, %c0_i32 : i32, i32
  }
  func.func @transform_1(%arg0: i32) -> (i32, i32) {
    %c0_i32 = arith.constant 0 : i32
    %c0_i32_0 = arith.constant 0 : i32
    return %arg0, %c0_i32 : i32, i32
  }
}

</mosaic_0001>

<llo_original>
// kernel: tpu_custom_call.1
$region0: #{tpu_custom_call.1}
  #allocation0 [shape = 'u32[]', space=smem, size = 0x4, offset = 0x4, fixed_abs, tag = 'smem constant byte address 0x4 - core index']
  #allocation1 [shape = 'u32[144,128]{1,0:T(1,128)}', space=vmem, size = 0x12000, scoped, tag = 'internal scratch']
  %s0 = inlined_call_operand.hbm [shape: f32[16,128], index: 0, kind: input, shape index: {}]
  %s1 = inlined_call_operand.hbm [shape: f32[16,128], index: 1, kind: output, shape index: {}]
  %s2 = sld [smem:[#allocation0]]
  $region18: #{tpu_custom_call.1} parent=0
    _
  %s4 = ssub.s32 1, %s2
  %s5 = scalar_select 0, %s4, %s2
  $region1: #{tpu_custom_call.1} parent=0
    #allocation2 [shape = 'u8[8192]{0}', space=vmem, size = 0x2000, scoped, tag = 'input window, operand 0, single buffered']
    #allocation3 [shape = 's32[1]{0}', space=sflag, size = 0x4, scoped, tag = 'scoped memory for tpu_custom_call.1']
    #allocation4 [shape = 's32[1]{0}', space=sflag, size = 0x4, scoped, tag = 'scoped memory for tpu_custom_call.1']
    #allocation5 [shape = 'u8[8192]{0}', space=vmem, size = 0x2000, scoped, tag = 'output window, operand 0, single buffered']
    %6 = vsyncpa [#allocation3], 0
    %7 = vsyncpa [#allocation4], 0
    // Predicated region
    $region2: #{tpu_custom_call.1} parent=1 // pred_check
      _
    $region3: #{tpu_custom_call.1} parent=1 // pred_check_branch
      %9 = sbr.rel (0) target = $region5
    $region4: #{tpu_custom_call.1} parent=1 // pred_region
      %s11 = ssub.s32 256, 256
      %12 = vsyncadd [#allocation3], %s11
      %s13 = sshll.u32 [#allocation2], 4
      %s14 = int_to_ptr.vmem [resolvable:$true] %s13
      %19 = dma.hbm_to_vmem [thread:$0]  %s0, 256, %s14, [#allocation3], 128, 128, 8
    $region5: #{tpu_custom_call.1} parent=1 // pred_fallthru
      _
    // Predicated region
    $region6: #{tpu_custom_call.1} parent=1 // pred_check
      _
    $region7: #{tpu_custom_call.1} parent=1 // pred_check_branch
      %21 = sbr.rel (0) target = $region9
    $region8: #{tpu_custom_call.1} parent=1 // pred_region
      %22 = dma.done [#allocation3], 256
    $region9: #{tpu_custom_call.1} parent=1 // pred_fallthru
      _
    %v23 = vld [vmem:[#allocation2] sm:$0xff]
    %v24 = vld [vmem:[#allocation2 + $0x8] sm:$0xff]
    %v25 = vmul.f32 %v23, 0.5
    %v26 = vmul.f32 %v24, 0.5
    %v27 = vtanh.pop %v25
    %v28 = vtanh.pop %v26
    %v29 = vadd.f32 %v27, 1.0
    %v30 = vadd.f32 %v28, 1.0
    %v31 = vmul.f32 %v29, 0.5
    %v32 = vmul.f32 %v30, 0.5
    %v33 = vmul.f32 %v23, %v31
    %v34 = vmul.f32 %v24, %v32
    %35 = vst [vmem:[#allocation5] sm:$0xff] %v33
    %36 = vst [vmem:[#allocation5 + $0x8] sm:$0xff] %v34
    // Predicated region
    $region10: #{tpu_custom_call.1} parent=1 // pred_check
      _
    $region11: #{tpu_custom_call.1} parent=1 // pred_check_branch
      %38 = sbr.rel (0) target = $region13
    $region12: #{tpu_custom_call.1} parent=1 // pred_region
      %s40 = ssub.s32 256, 256
      %41 = vsyncadd [#allocation4], %s40
      %s42 = sshll.u32 [#allocation5], 4
      %s43 = int_to_ptr.vmem [resolvable:$true] %s42
      %48 = dma.vmem_to_hbm [thread:$0]  %s43, 256, %s1, [#allocation4], 128, 128, 8
    $region13: #{tpu_custom_call.1} parent=1 // pred_fallthru
      _
    // Predicated region
    $region14: #{tpu_custom_call.1} parent=1 // pred_check
      _
    $region15: #{tpu_custom_call.1} parent=1 // pred_check_branch
      %50 = sbr.rel (0) target = $region17
    $region16: #{tpu_custom_call.1} parent=1 // pred_region
      %51 = dma.done [#allocation4], 256
    $region17: #{tpu_custom_call.1} parent=1 // pred_fallthru
      _
    %52 = vsyncpa [#allocation3], 1
    %53 = vsyncpa [#allocation4], 1

</llo_original>
